<compile_context>
chip_gen: v7x
topology: tpu7x:2x2x1
jax: 0.10.0
libtpu: 0.0.40
codegen_flags: <defaults>
</compile_context>

<pallas_src>
import functools

import jax
import jax.numpy as jnp
from jax.experimental import pallas as pl
from jax.experimental.pallas import tpu as pltpu

DIMS = (128, 256, 512, 1024)        # ConvNeXt-Base stage widths
DEPTHS = (3, 3, 27, 3)              # ConvNeXt-Base stage depths

# TODO(synk): make the VMEM cap generation-aware (v7x has 64 MiB physical/TC).
_VMEM_LIMIT = 64 * 1024 * 1024


# ----------------------------------------------------------------------------
# tiling helpers
# ----------------------------------------------------------------------------
def _round_up(x, m):
    return (x + m - 1) // m * m


def _tile_rows(m, target=512):
    """Largest multiple-of-16 divisor of m that is <= target (else full m)."""
    if m <= target:
        return m
    for t in range(target - target % 16, 15, -16):
        if m % t == 0:
            return t
    return m


def _tile_cols(n, target=512):
    """Largest multiple-of-128 divisor of n that is <= target (else full n)."""
    if n <= target:
        return n
    for t in range(target - target % 128, 127, -128):
        if n % t == 0:
            return t
    return n


def _cparams(grid_rank):
    return pltpu.CompilerParams(
        dimension_semantics=("parallel",) * grid_rank,
        vmem_limit_bytes=_VMEM_LIMIT,
    )


# ----------------------------------------------------------------------------
# Pallas kernels
# ----------------------------------------------------------------------------
def _matmul_kernel(x_ref, w_ref, b_ref, o_ref):
    # plain (TM,K) @ (K,TN) + b ; bf16 MXU operands, f32 accumulation.
    y = jnp.dot(x_ref[...].astype(jnp.bfloat16), w_ref[...],
                preferred_element_type=jnp.float32)
    o_ref[...] = (y + b_ref[...]).astype(o_ref.dtype)


def _ln_matmul_gelu_kernel(x_ref, g_ref, b_ref, w_ref, bias_ref, o_ref):
    # Fused: LayerNorm(eps=1e-6) prologue -> Linear -> GELU epilogue.
    x = x_ref[...].astype(jnp.float32)
    mu = jnp.mean(x, axis=-1, keepdims=True)
    xc = x - mu
    var = jnp.mean(xc * xc, axis=-1, keepdims=True)
    xn = xc * jax.lax.rsqrt(var + 1e-6) * g_ref[...] + b_ref[...]
    y = jnp.dot(xn.astype(jnp.bfloat16), w_ref[...],
                preferred_element_type=jnp.float32)
    # TODO(synk): torchvision nn.GELU() is exact (erf); tanh approximation used
    # here for guaranteed Mosaic lowering.
    y = jax.nn.gelu(y + bias_ref[...], approximate=True)
    o_ref[...] = y.astype(o_ref.dtype)


def _matmul_scale_residual_kernel(h_ref, w_ref, bias_ref, ls_ref, res_ref, o_ref):
    # Fused: Linear -> out = residual + layer_scale * y.
    y = jnp.dot(h_ref[...].astype(jnp.bfloat16), w_ref[...],
                preferred_element_type=jnp.float32)
    y = y + bias_ref[...]
    o_ref[...] = (res_ref[...] + ls_ref[...] * y).astype(o_ref.dtype)


def _layernorm_kernel(x_ref, g_ref, b_ref, o_ref):
    # LayerNorm over channel dim, eps=1e-6 (torchvision ConvNeXt).
    x = x_ref[...].astype(jnp.float32)
    mu = jnp.mean(x, axis=-1, keepdims=True)
    xc = x - mu
    var = jnp.mean(xc * xc, axis=-1, keepdims=True)
    y = xc * jax.lax.rsqrt(var + 1e-6)
    o_ref[...] = (y * g_ref[...] + b_ref[...]).astype(o_ref.dtype)


def _dwconv_kernel(x_ref, w_ref, b_ref, o_ref, *, H, W, Wp):
    # depthwise 7x7 conv (pad=3 applied outside); x block: (1, H+6, Wp, C).
    # kw shifts are done with 7 XLU sublane rolls of the full padded block;
    # kh shifts are slices along the (untiled) leading H dim.
    x = x_ref[0].astype(jnp.float32)          # (H+6, Wp, C)
    w = w_ref[...].astype(jnp.float32)        # (7, 7, C)
    C = x.shape[-1]
    acc = jnp.zeros((H, Wp, C), jnp.float32)
    for kw in range(7):
        # rolled[:, j, :] == x[:, j + kw, :] for all j < W (wrap lands in the
        # discarded tail because Wp >= W + 6).
        xs = x if kw == 0 else pltpu.roll(x, shift=Wp - kw, axis=1)
        for kh in range(7):
            acc = acc + xs[kh:kh + H, :, :] * w[kh, kw, :]
    o_ref[0] = (acc[:, :W, :] + b_ref[...]).astype(o_ref.dtype)


def _head_kernel(x_ref, g_ref, b_ref, w_ref, bias_ref, o_ref):
    # Fused classifier head: global avg-pool -> LayerNorm2d -> Linear -> L2 norm.
    pooled = jnp.mean(x_ref[...].astype(jnp.float32), axis=1)      # (N, C)
    mu = jnp.mean(pooled, axis=-1, keepdims=True)
    xc = pooled - mu
    var = jnp.mean(xc * xc, axis=-1, keepdims=True)
    xn = xc * jax.lax.rsqrt(var + 1e-6) * g_ref[...] + b_ref[...]
    y = jnp.dot(xn.astype(jnp.bfloat16), w_ref[...],
                preferred_element_type=jnp.float32) + bias_ref[...]
    nrm = jnp.sqrt(jnp.sum(y * y, axis=-1, keepdims=True))         # F.normalize
    o_ref[...] = (y / jnp.maximum(nrm, 1e-12)).astype(o_ref.dtype)


# ----------------------------------------------------------------------------
# wrappers (pallas_call with BlockSpecs / grids)
# ----------------------------------------------------------------------------
@jax.jit
def linear(x, w, b2d):
    """(M,K)f32 @ (K,N)bf16 + b ; tiled over (M, N), K resident."""
    M, K = x.shape
    _, N = w.shape
    TM, TN = _tile_rows(M), _tile_cols(N)
    return pl.pallas_call(
        _matmul_kernel,
        out_shape=jax.ShapeDtypeStruct((M, N), jnp.float32),
        grid_spec=pltpu.PrefetchScalarGridSpec(
            num_scalar_prefetch=0,
            grid=(M // TM, N // TN),
            in_specs=[
                pl.BlockSpec((TM, K), lambda i, j: (i, 0)),
                pl.BlockSpec((K, TN), lambda i, j: (0, j)),
                pl.BlockSpec((1, TN), lambda i, j: (0, j)),
            ],
            out_specs=pl.BlockSpec((TM, TN), lambda i, j: (i, j)),
        ),
        compiler_params=_cparams(2),
    )(x, w, b2d)


@jax.jit
def ln_linear_gelu(x, g2d, b2d, w, bias2d):
    """LayerNorm -> Linear -> GELU fused; output kept bf16 (MXU feed only)."""
    M, K = x.shape
    _, N = w.shape
    TM, TN = _tile_rows(M), _tile_cols(N)
    return pl.pallas_call(
        _ln_matmul_gelu_kernel,
        out_shape=jax.ShapeDtypeStruct((M, N), jnp.bfloat16),
        grid_spec=pltpu.PrefetchScalarGridSpec(
            num_scalar_prefetch=0,
            grid=(M // TM, N // TN),
            in_specs=[
                pl.BlockSpec((TM, K), lambda i, j: (i, 0)),
                pl.BlockSpec((1, K), lambda i, j: (0, 0)),
                pl.BlockSpec((1, K), lambda i, j: (0, 0)),
                pl.BlockSpec((K, TN), lambda i, j: (0, j)),
                pl.BlockSpec((1, TN), lambda i, j: (0, j)),
            ],
            out_specs=pl.BlockSpec((TM, TN), lambda i, j: (i, j)),
        ),
        compiler_params=_cparams(2),
    )(x, g2d, b2d, w, bias2d)


@jax.jit
def linear_scale_residual(h, w, bias2d, ls2d, res):
    """Linear -> out = res + layer_scale * y fused."""
    M, K = h.shape
    _, N = w.shape
    TM, TN = _tile_rows(M), _tile_cols(N)
    return pl.pallas_call(
        _matmul_scale_residual_kernel,
        out_shape=jax.ShapeDtypeStruct((M, N), jnp.float32),
        grid_spec=pltpu.PrefetchScalarGridSpec(
            num_scalar_prefetch=0,
            grid=(M // TM, N // TN),
            in_specs=[
                pl.BlockSpec((TM, K), lambda i, j: (i, 0)),
                pl.BlockSpec((K, TN), lambda i, j: (0, j)),
                pl.BlockSpec((1, TN), lambda i, j: (0, j)),
                pl.BlockSpec((1, TN), lambda i, j: (0, j)),
                pl.BlockSpec((TM, TN), lambda i, j: (i, j)),
            ],
            out_specs=pl.BlockSpec((TM, TN), lambda i, j: (i, j)),
        ),
        compiler_params=_cparams(2),
    )(h, w, bias2d, ls2d, res)


@jax.jit
def layernorm(x, g2d, b2d):
    M, C = x.shape
    TM = _tile_rows(M, target=1024)
    return pl.pallas_call(
        _layernorm_kernel,
        out_shape=jax.ShapeDtypeStruct((M, C), jnp.float32),
        grid_spec=pltpu.PrefetchScalarGridSpec(
            num_scalar_prefetch=0,
            grid=(M // TM,),
            in_specs=[
                pl.BlockSpec((TM, C), lambda i: (i, 0)),
                pl.BlockSpec((1, C), lambda i: (0, 0)),
                pl.BlockSpec((1, C), lambda i: (0, 0)),
            ],
            out_specs=pl.BlockSpec((TM, C), lambda i: (i, 0)),
        ),
        compiler_params=_cparams(1),
    )(x, g2d, b2d)


@jax.jit
def dwconv7x7(x, w, b2d):
    """Depthwise 7x7, padding=3, stride 1 (NHWC)."""
    N, H, W, C = x.shape
    Wp = _round_up(W + 6, 8)                  # halo + sublane alignment
    x_pad = jnp.pad(x, ((0, 0), (3, 3), (3, Wp - W - 3), (0, 0)))
    # TODO(synk): for very large H/W tile over rows with a 6-row halo instead of
    # one whole-image block (bounds VMEM on v7x); whole-image blocks are fine at
    # these shapes.
    return pl.pallas_call(
        functools.partial(_dwconv_kernel, H=H, W=W, Wp=Wp),
        out_shape=jax.ShapeDtypeStruct((N, H, W, C), jnp.float32),
        grid_spec=pltpu.PrefetchScalarGridSpec(
            num_scalar_prefetch=0,
            grid=(N,),
            in_specs=[
                pl.BlockSpec((1, H + 6, Wp, C), lambda n: (n, 0, 0, 0)),
                pl.BlockSpec((7, 7, C), lambda n: (0, 0, 0)),
                pl.BlockSpec((1, C), lambda n: (0, 0)),
            ],
            out_specs=pl.BlockSpec((1, H, W, C), lambda n: (n, 0, 0, 0)),
        ),
        compiler_params=_cparams(1),
    )(x_pad, w, b2d)


@jax.jit
def head_fused(x3, g2d, b2d, w, bias2d):
    """(N, H*W, C) -> pooled -> LN -> Linear(1024->512) -> L2 normalize."""
    N, _, C = x3.shape
    _, D = w.shape
    return pl.pallas_call(
        _head_kernel,
        out_shape=jax.ShapeDtypeStruct((N, D), jnp.float32),
        compiler_params=pltpu.CompilerParams(vmem_limit_bytes=_VMEM_LIMIT),
    )(x3, g2d, b2d, w, bias2d)


# ----------------------------------------------------------------------------
# Parameters (deterministic synthetic init; shapes of ConvNeXt-Base as modified
# in Net.__init__; preprocess folded into the stem conv)
# ----------------------------------------------------------------------------
def _normal(key, shape, scale=0.02):
    return scale * jax.random.normal(key, shape, dtype=jnp.float32)


def init_params(seed=0):
    key = jax.random.PRNGKey(seed)
    counter = [0]

    def nk():
        counter[0] += 1
        return jax.random.fold_in(key, counter[0])

    p = {}
    # Stem: Conv2d(4, 128, k=4, s=4); 4th input-channel weights zeroed (mirrors
    # the weight surgery in Net.__init__).  The per-channel (x-mean)/std
    # preprocessing is folded in:  w' = w*istd (along cin),  b' = b - sum(w*mean*istd).
    w_stem = _normal(nk(), (4, 4, 4, DIMS[0]))            # (kh, kw, cin, cout)
    w_stem = w_stem.at[:, :, 3, :].set(0.0)
    b_stem = _normal(nk(), (1, DIMS[0]))
    mean = jnp.array([123.68, 116.779, 103.939, 0.0], jnp.float32)
    istd = jnp.array([1.0 / 65.0, 1.0 / 65.0, 1.0 / 65.0, 1.0], jnp.float32)
    w_fold = w_stem * istd[None, None, :, None]
    b_fold = b_stem - jnp.sum(
        w_stem * (mean * istd)[None, None, :, None], axis=(0, 1, 2))[None, :]
    p["stem_w"] = w_fold.reshape(4 * 4 * 4, DIMS[0]).astype(jnp.bfloat16)
    p["stem_b"] = b_fold
    p["stem_ln_g"] = jnp.ones((1, DIMS[0]), jnp.float32)
    p["stem_ln_b"] = jnp.zeros((1, DIMS[0]), jnp.float32)

    p["stages"] = []
    for s, (dim, depth) in enumerate(zip(DIMS, DEPTHS)):
        blocks = []
        for _ in range(depth):
            blocks.append(dict(
                dw_w=_normal(nk(), (7, 7, dim)),
                dw_b=_normal(nk(), (1, dim)),
                ln_g=jnp.ones((1, dim), jnp.float32),
                ln_b=jnp.zeros((1, dim), jnp.float32),
                w1=_normal(nk(), (dim, 4 * dim)).astype(jnp.bfloat16),
                b1=_normal(nk(), (1, 4 * dim)),
                w2=_normal(nk(), (4 * dim, dim)).astype(jnp.bfloat16),
                b2=_normal(nk(), (1, dim)),
                ls=jnp.full((1, dim), 1e-6, jnp.float32),   # layer_scale init
            ))
        stage = {"blocks": blocks}
        if s < 3:  # downsample: LayerNorm2d + Conv2d(k=2, s=2)
            cin, cout = dim, DIMS[s + 1]
            stage["ds_ln_g"] = jnp.ones((1, cin), jnp.float32)
            stage["ds_ln_b"] = jnp.zeros((1, cin), jnp.float32)
            stage["ds_w"] = _normal(nk(), (2 * 2 * cin, cout)).astype(jnp.bfloat16)
            stage["ds_b"] = _normal(nk(), (1, cout))
        p["stages"].append(stage)

    # Classifier: LayerNorm2d(1024) -> Flatten -> Linear(1024, 512) (replaced head)
    p["head_ln_g"] = jnp.ones((1, DIMS[-1]), jnp.float32)
    p["head_ln_b"] = jnp.zeros((1, DIMS[-1]), jnp.float32)
    p["head_w"] = _normal(nk(), (DIMS[-1], 512)).astype(jnp.bfloat16)
    p["head_b"] = _normal(nk(), (1, 512))
    return p


# ----------------------------------------------------------------------------
# Forward pass (glue: reshapes / padding / patch extraction; compute: Pallas)
# ----------------------------------------------------------------------------
def patchify(x, k):
    """(N,H,W,C) -> (N*(H/k)*(W/k), k*k*C) with patch order (kh, kw, cin)."""
    # TODO(synk): could be folded into the matmul BlockSpec index_map to avoid
    # the XLA transpose copy; only hit at the stem + 3 downsamples.
    N, H, W, C = x.shape
    x = x.reshape(N, H // k, k, W // k, k, C).transpose(0, 1, 3, 2, 4, 5)
    return x.reshape(N * (H // k) * (W // k), k * k * C), (N, H // k, W // k)


def cn_block(x, p):
    N, H, W, C = x.shape
    y = dwconv7x7(x, p["dw_w"], p["dw_b"])                       # depthwise 7x7
    yf = y.reshape(N * H * W, C)
    h = ln_linear_gelu(yf, p["ln_g"], p["ln_b"], p["w1"], p["b1"])   # LN + MLP-in + GELU
    out = linear_scale_residual(h, p["w2"], p["b2"], p["ls"],
                                x.reshape(N * H * W, C))         # MLP-out + ls*y + x
    # TODO(synk): StochasticDepth treated as identity (inference behaviour).
    return out.reshape(N, H, W, C)


def net_forward(params, images, mask, train_mode=True):
    """images: (N, H, W, 3); mask: (N, H, W)."""
    # TODO(synk): TrainMode=False (fp16) path not exercised; compute stays float32.
    out_dtype = jnp.float32 if train_mode else jnp.float16
    N, H, W, _ = images.shape

    # preprocess ((x-mean)/std) is folded into the stem weights; only the channel
    # concat with the mask remains as layout glue.
    x = jnp.concatenate(
        [images.astype(jnp.float32), mask.astype(jnp.float32)[..., None]], axis=-1
    )                                                             # (N, H, W, 4)

    # --- stem: Conv2d(4->128, k=4, s=4) as patchify matmul + LayerNorm ---
    xf, (_, Hc, Wc) = patchify(x, 4)
    xf = linear(xf, params["stem_w"], params["stem_b"])
    xf = layernorm(xf, params["stem_ln_g"], params["stem_ln_b"])
    x = xf.reshape(N, Hc, Wc, DIMS[0])

    # --- 4 stages of CN blocks + downsampling ---
    for s, stage in enumerate(params["stages"]):
        for blk in stage["blocks"]:
            x = cn_block(x, blk)
        if s < 3:
            N_, H_, W_, C_ = x.shape
            xf = layernorm(x.reshape(N_ * H_ * W_, C_),
                           stage["ds_ln_g"], stage["ds_ln_b"])
            xf, (_, Hn, Wn) = patchify(xf.reshape(N_, H_, W_, C_), 2)
            xf = linear(xf, stage["ds_w"], stage["ds_b"])
            x = xf.reshape(N_, Hn, Wn, DIMS[s + 1])

    # --- fused head: global avg pool + LayerNorm2d + Linear + L2 normalize ---
    N_, H_, W_, C_ = x.shape
    desc = head_fused(x.reshape(N_, H_ * W_, C_),
                      params["head_ln_g"], params["head_ln_b"],
                      params["head_w"], params["head_b"])         # (N, 512)
    return desc.astype(out_dtype)


if __name__ == "__main__":
    key = jax.random.PRNGKey(0)
    k_img, k_msk = jax.random.split(key)
    N, H, W = 2, 64, 64
    images = jax.random.uniform(k_img, (N, H, W, 3), jnp.float32, 0.0, 255.0)
    mask = (jax.random.uniform(k_msk, (N, H, W)) > 0.5).astype(jnp.float32)

    params = init_params(seed=0)
    desc = net_forward(params, images, mask, train_mode=True)
    desc = jax.block_until_ready(desc)

    assert desc.shape == (N, 512), desc.shape
    assert bool(jnp.all(jnp.isfinite(desc)))
    # descriptors are unit-norm after F.normalize
    norms = jnp.linalg.norm(desc.astype(jnp.float32), axis=1)
    assert bool(jnp.all(jnp.abs(norms - 1.0) < 1e-3)), norms
    print("KERNEL_OK")
</pallas_src>

<mosaic_0001>
module attributes {stable_mosaic.version = 11 : i64} {
  func.func @_matmul_kernel(%arg0: i32, %arg1: i32, %arg2: memref<512x64xf32, #tpu.memory_space<vmem>>, %arg3: memref<64x128xbf16, #tpu.memory_space<vmem>>, %arg4: memref<1x128xf32, #tpu.memory_space<vmem>>, %arg5: memref<512x128xf32, #tpu.memory_space<vmem>>) attributes {dimension_semantics = [#tpu.dimension_semantics<parallel>, #tpu.dimension_semantics<parallel>], iteration_bounds = array<i64: 1, 1>, scalar_prefetch = 0 : i64, scratch_operands = 0 : i64, tpu.core_type = #tpu.core_type<tc>, window_params = [{transform_indices = @transform_0, window_bounds = array<i64: 512, 64>}, {transform_indices = @transform_1, window_bounds = array<i64: 64, 128>}, {transform_indices = @transform_2, window_bounds = array<i64: 1, 128>}, {transform_indices = @transform_3, window_bounds = array<i64: 512, 128>}]} {
    %c0 = arith.constant 0 : index
    %c0_0 = arith.constant 0 : index
    %0 = vector.load %arg2[%c0, %c0_0] : memref<512x64xf32, #tpu.memory_space<vmem>>, vector<512x64xf32>
    %1 = arith.truncf %0 : vector<512x64xf32> to vector<512x64xbf16>
    %c0_1 = arith.constant 0 : index
    %c0_2 = arith.constant 0 : index
    %2 = vector.load %arg3[%c0_1, %c0_2] : memref<64x128xbf16, #tpu.memory_space<vmem>>, vector<64x128xbf16>
    %cst = arith.constant dense<0.000000e+00> : vector<512x128xf32>
    %3 = tpu.matmul %1, %2, %cst {dimension_numbers = #tpu.dot_dimension_numbers<[1], [0], [0], [1], [0, 0, 1, 1], [], []>} : vector<512x64xbf16>, vector<64x128xbf16>, vector<512x128xf32> -> vector<512x128xf32>
    %c0_3 = arith.constant 0 : index
    %c0_4 = arith.constant 0 : index
    %4 = vector.load %arg4[%c0_3, %c0_4] : memref<1x128xf32, #tpu.memory_space<vmem>>, vector<1x128xf32>
    %5 = vector.broadcast %4 : vector<1x128xf32> to vector<512x128xf32>
    %6 = arith.addf %3, %5 : vector<512x128xf32>
    %c0_5 = arith.constant 0 : index
    %c0_6 = arith.constant 0 : index
    %7 = vector.load %arg5[%c0_5, %c0_6] : memref<512x128xf32, #tpu.memory_space<vmem>>, vector<512x128xf32>
    tpu.vector_store %arg5[%c0_5, %c0_6], %6 {strides = array<i32>} : memref<512x128xf32, #tpu.memory_space<vmem>>, vector<512x128xf32>,
    return
  }
  func.func @transform_0(%arg0: i32, %arg1: i32) -> (i32, i32) {
    %c0_i32 = arith.constant 0 : i32
    %c0_i32_0 = arith.constant 0 : i32
    return %arg0, %c0_i32 : i32, i32
  }
  func.func @transform_1(%arg0: i32, %arg1: i32) -> (i32, i32) {
    %c0_i32 = arith.constant 0 : i32
    %c0_i32_0 = arith.constant 0 : i32
    return %c0_i32, %arg1 : i32, i32
  }
  func.func @transform_2(%arg0: i32, %arg1: i32) -> (i32, i32) {
    %c0_i32 = arith.constant 0 : i32
    %c0_i32_0 = arith.constant 0 : i32
    return %c0_i32, %arg1 : i32, i32
  }
  func.func @transform_3(%arg0: i32, %arg1: i32) -> (i32, i32) {
    %c0_i32 = arith.constant 0 : i32
    return %arg0, %arg1 : i32, i32
  }
}

</mosaic_0001>

<llo_original>
// kernel: linear.1
$region0: #{linear.1}
  #allocation0 [shape = 'u32[]', space=smem, size = 0x4, offset = 0x4, fixed_abs, tag = 'smem constant byte address 0x4 - core index']
  #allocation1 [shape = 'u32[144,128]{1,0:T(1,128)}', space=vmem, size = 0x12000, scoped, tag = 'internal scratch']
  %s0 = inlined_call_operand.hbm [shape: f32[512,64], index: 0, kind: input, shape index: {}]
  %s1 = inlined_call_operand.hbm [shape: bf16[64,128], index: 1, kind: input, shape index: {}]
  %s2 = inlined_call_operand.hbm [shape: f32[1,128], index: 2, kind: input, shape index: {}]
  %s3 = inlined_call_operand.hbm [shape: f32[512,128], index: 3, kind: output, shape index: {}]
  %s4 = sld [smem:[#allocation0]]
  $region34: #{linear.1} parent=0
    _
  %s6 = ssub.s32 1, %s4
  %s7 = scalar_select 0, %s6, %s4
  $region1: #{linear.1} parent=0
    #allocation2 [shape = 'u8[262144]{0}', space=vmem, size = 0x40000, scoped, tag = 'input window, operand 0, single buffered']
    #allocation3 [shape = 's32[1]{0}', space=sflag, size = 0x4, scoped, tag = 'scoped memory for linear.1']
    #allocation4 [shape = 's32[1]{0}', space=sflag, size = 0x4, scoped, tag = 'scoped memory for linear.1']
    #allocation5 [shape = 'u8[16384]{0}', space=vmem, size = 0x4000, scoped, tag = 'input window, operand 1, single buffered']
    #allocation6 [shape = 's32[1]{0}', space=sflag, size = 0x4, scoped, tag = 'scoped memory for linear.1']
    #allocation7 [shape = 'u8[512]{0}', space=vmem, size = 0x400, scoped, tag = 'input window, operand 2, single buffered']
    #allocation8 [shape = 'u8[262144]{0}', space=vmem, size = 0x40000, scoped, tag = 'output window, operand 0, single buffered']
    %8 = vsyncpa [#allocation3], 0
    %9 = vsyncpa [#allocation6], 0
    %10 = vsyncpa [#allocation4], 0
    // Predicated region
    $region2: #{linear.1} parent=1 // pred_check
      _
    $region3: #{linear.1} parent=1 // pred_check_branch
      %12 = sbr.rel (0) target = $region5
    $region4: #{linear.1} parent=1 // pred_region
      %s14 = ssub.s32 8192, 8192
      %15 = vsyncadd [#allocation3], %s14
      %s16 = sshll.u32 [#allocation2], 4
      %s17 = int_to_ptr.vmem [resolvable:$true] %s16
      %22 = dma.hbm_to_vmem [thread:$0]  %s0, 8192, %s17, [#allocation3], 128, 128, 8
    $region5: #{linear.1} parent=1 // pred_fallthru
      _
    // Predicated region
    $region6: #{linear.1} parent=1 // pred_check
      _
    $region7: #{linear.1} parent=1 // pred_check_branch
      %24 = sbr.rel (0) target = $region9
    $region8: #{linear.1} parent=1 // pred_region
      %s26 = ssub.s32 512, 512
      %27 = vsyncadd [#allocation6], %s26
      %s28 = sshll.u32 [#allocation5], 4
      %s29 = int_to_ptr.vmem [resolvable:$true] %s28
      %34 = dma.hbm_to_vmem [thread:$0]  %s1, 512, %s29, [#allocation6], 64, 64, 4
    $region9: #{linear.1} parent=1 // pred_fallthru
      _
    // Predicated region
    $region10: #{linear.1} parent=1 // pred_check
      _
    $region11: #{linear.1} parent=1 // pred_check_branch
      %36 = sbr.rel (0) target = $region13
    $region12: #{linear.1} parent=1 // pred_region
      %s38 = ssub.s32 16, 16
      %39 = vsyncadd [#allocation6], %s38
      %s41 = sshll.u32 [#allocation7], 4
      %s42 = int_to_ptr.vmem [resolvable:$true] %s41
      %44 = dma.hbm_to_vmem [thread:$0]  %s2, 16, %s42, [#allocation6]
    $region13: #{linear.1} parent=1 // pred_fallthru
      _
    // Predicated region
    $region14: #{linear.1} parent=1 // pred_check
      _
    $region15: #{linear.1} parent=1 // pred_check_branch
      %46 = sbr.rel (0) target = $region17
    $region16: #{linear.1} parent=1 // pred_region
      %47 = dma.done [#allocation3], 8192
    $region17: #{linear.1} parent=1 // pred_fallthru
      _
    // Predicated region
    $region18: #{linear.1} parent=1 // pred_check
      _
    $region19: #{linear.1} parent=1 // pred_check_branch
      %49 = sbr.rel (0) target = $region21
    $region20: #{linear.1} parent=1 // pred_region
      %50 = dma.done [#allocation6], 512
    $region21: #{linear.1} parent=1 // pred_fallthru
      _
    // Predicated region
    $region22: #{linear.1} parent=1 // pred_check
      _
    $region23: #{linear.1} parent=1 // pred_check_branch
      %52 = sbr.rel (0) target = $region25
    $region24: #{linear.1} parent=1 // pred_region
      %53 = dma.done [#allocation6], 16
    $region25: #{linear.1} parent=1 // pred_fallthru
      _
    %v55 = vld [vmem:[#allocation2] sm:$0xff]
    %v56 = vld [vmem:[#allocation2 + $0x8] sm:$0xff]
    %v57 = vld [vmem:[#allocation2 + $0x10] sm:$0xff]
    %v58 = vld [vmem:[#allocation2 + $0x18] sm:$0xff]
    %v59 = vld [vmem:[#allocation2 + $0x20] sm:$0xff]
    %v60 = vld [vmem:[#allocation2 + $0x28] sm:$0xff]
    %v61 = vld [vmem:[#allocation2 + $0x30] sm:$0xff]
    %v62 = vld [vmem:[#allocation2 + $0x38] sm:$0xff]
    %v63 = vld [vmem:[#allocation2 + $0x40] sm:$0xff]
    %v64 = vld [vmem:[#allocation2 + $0x48] sm:$0xff]
    %v65 = vld [vmem:[#allocation2 + $0x50] sm:$0xff]
    %v66 = vld [vmem:[#allocation2 + $0x58] sm:$0xff]
    %v67 = vld [vmem:[#allocation2 + $0x60] sm:$0xff]
    %v68 = vld [vmem:[#allocation2 + $0x68] sm:$0xff]
    %v69 = vld [vmem:[#allocation2 + $0x70] sm:$0xff]
    %v70 = vld [vmem:[#allocation2 + $0x78] sm:$0xff]
    %v71 = vld [vmem:[#allocation2 + $0x80] sm:$0xff]
    %v72 = vld [vmem:[#allocation2 + $0x88] sm:$0xff]
    %v73 = vld [vmem:[#allocation2 + $0x90] sm:$0xff]
    %v74 = vld [vmem:[#allocation2 + $0x98] sm:$0xff]
    %v75 = vld [vmem:[#allocation2 + $0xa0] sm:$0xff]
    %v76 = vld [vmem:[#allocation2 + $0xa8] sm:$0xff]
    %v77 = vld [vmem:[#allocation2 + $0xb0] sm:$0xff]
    %v78 = vld [vmem:[#allocation2 + $0xb8] sm:$0xff]
    %v79 = vld [vmem:[#allocation2 + $0xc0] sm:$0xff]
    %v80 = vld [vmem:[#allocation2 + $0xc8] sm:$0xff]
    %v81 = vld [vmem:[#allocation2 + $0xd0] sm:$0xff]
    %v82 = vld [vmem:[#allocation2 + $0xd8] sm:$0xff]
    %v83 = vld [vmem:[#allocation2 + $0xe0] sm:$0xff]
    %v84 = vld [vmem:[#allocation2 + $0xe8] sm:$0xff]
    %v85 = vld [vmem:[#allocation2 + $0xf0] sm:$0xff]
    %v86 = vld [vmem:[#allocation2 + $0xf8] sm:$0xff]
    %v87 = vld [vmem:[#allocation2 + $0x100] sm:$0xff]
    %v88 = vld [vmem:[#allocation2 + $0x108] sm:$0xff]
    %v89 = vld [vmem:[#allocation2 + $0x110] sm:$0xff]
    %v90 = vld [vmem:[#allocation2 + $0x118] sm:$0xff]
    %v91 = vld [vmem:[#allocation2 + $0x120] sm:$0xff]
    %v92 = vld [vmem:[#allocation2 + $0x128] sm:$0xff]
    %v93 = vld [vmem:[#allocation2 + $0x130] sm:$0xff]
    %v94 = vld [vmem:[#allocation2 + $0x138] sm:$0xff]
    %v95 = vld [vmem:[#allocation2 + $0x140] sm:$0xff]
    %v96 = vld [vmem:[#allocation2 + $0x148] sm:$0xff]
    %v97 = vld [vmem:[#allocation2 + $0x150] sm:$0xff]
    %v98 = vld [vmem:[#allocation2 + $0x158] sm:$0xff]
    %v99 = vld [vmem:[#allocation2 + $0x160] sm:$0xff]
    %v100 = vld [vmem:[#allocation2 + $0x168] sm:$0xff]
    %v101 = vld [vmem:[#allocation2 + $0x170] sm:$0xff]
    %v102 = vld [vmem:[#allocation2 + $0x178] sm:$0xff]
    %v103 = vld [vmem:[#allocation2 + $0x180] sm:$0xff]
    %v104 = vld [vmem:[#allocation2 + $0x188] sm:$0xff]
    %v105 = vld [vmem:[#allocation2 + $0x190] sm:$0xff]
    %v106 = vld [vmem:[#allocation2 + $0x198] sm:$0xff]
    %v107 = vld [vmem:[#allocation2 + $0x1a0] sm:$0xff]
    %v108 = vld [vmem:[#allocation2 + $0x1a8] sm:$0xff]
    %v109 = vld [vmem:[#allocation2 + $0x1b0] sm:$0xff]
    %v110 = vld [vmem:[#allocation2 + $0x1b8] sm:$0xff]
    %v111 = vld [vmem:[#allocation2 + $0x1c0] sm:$0xff]
    %v112 = vld [vmem:[#allocation2 + $0x1c8] sm:$0xff]
    %v113 = vld [vmem:[#allocation2 + $0x1d0] sm:$0xff]
    %v114 = vld [vmem:[#allocation2 + $0x1d8] sm:$0xff]
    %v115 = vld [vmem:[#allocation2 + $0x1e0] sm:$0xff]
    %v116 = vld [vmem:[#allocation2 + $0x1e8] sm:$0xff]
    %v117 = vld [vmem:[#allocation2 + $0x1f0] sm:$0xff]
    %v118 = vld [vmem:[#allocation2 + $0x1f8] sm:$0xff]
    %v119 = vpack.c.bf16 %v56, %v55
    %v120 = vpack.c.bf16 %v58, %v57
    %v121 = vpack.c.bf16 %v60, %v59
    %v122 = vpack.c.bf16 %v62, %v61
    %v123 = vpack.c.bf16 %v64, %v63
    %v124 = vpack.c.bf16 %v66, %v65
    %v125 = vpack.c.bf16 %v68, %v67
    %v126 = vpack.c.bf16 %v70, %v69
    %v127 = vpack.c.bf16 %v72, %v71
    %v128 = vpack.c.bf16 %v74, %v73
    %v129 = vpack.c.bf16 %v76, %v75
    %v130 = vpack.c.bf16 %v78, %v77
    %v131 = vpack.c.bf16 %v80, %v79
    %v132 = vpack.c.bf16 %v82, %v81
    %v133 = vpack.c.bf16 %v84, %v83
    %v134 = vpack.c.bf16 %v86, %v85
    %v135 = vpack.c.bf16 %v88, %v87
    %v136 = vpack.c.bf16 %v90, %v89
    %v137 = vpack.c.bf16 %v92, %v91
    %v138 = vpack.c.bf16 %v94, %v93
    %v139 = vpack.c.bf16 %v96, %v95
    %v140 = vpack.c.bf16 %v98, %v97
    %v141 = vpack.c.bf16 %v100, %v99
    %v142 = vpack.c.bf16 %v102, %v101
    %v143 = vpack.c.bf16 %v104, %v103
    %v144 = vpack.c.bf16 %v106, %v105
    %v145 = vpack.c.bf16 %v108, %v107
    %v146 = vpack.c.bf16 %v110, %v109
    %v147 = vpack.c.bf16 %v112, %v111
    %v148 = vpack.c.bf16 %v114, %v113
    %v149 = vpack.c.bf16 %v116, %v115
    %v150 = vpack.c.bf16 %v118, %v117
    %v151 = vld [vmem:[#allocation5] sm:$0xf]
    %v152 = vld [vmem:[#allocation5 + $0x4] sm:$0xf]
    %v153 = vld [vmem:[#allocation5 + $0x8] sm:$0xf]
    %v154 = vld [vmem:[#allocation5 + $0xc] sm:$0xf]
    %v155 = vld [vmem:[#allocation5 + $0x10] sm:$0xf]
    %v156 = vld [vmem:[#allocation5 + $0x14] sm:$0xf]
    %v157 = vld [vmem:[#allocation5 + $0x18] sm:$0xf]
    %v158 = vld [vmem:[#allocation5 + $0x1c] sm:$0xf]
    %v159 = vld [vmem:[#allocation7] sm:$0x1]
    %v161 = vlaneseq
    %v162 = vshrl.u32 %v161, 7
    %v163 = vsub.s32 0, %v162
    %v164 = vrot.slane %v159, %v163
    %v174 = vunpack.c.l.b16 %v151
    %v175 = vunpack.c.l.b16 %v152
    %v176 = vunpack.c.l.b16 %v153
    %v177 = vunpack.c.l.b16 %v154
    %v178 = vunpack.c.l.b16 %v155
    %v179 = vunpack.c.l.b16 %v156
    %v180 = vunpack.c.l.b16 %v157
    %v181 = vunpack.c.l.b16 %v158
    %v182 = vpack.c.b16 %v175, %v174
    %v183 = vpack.c.b16 %v177, %v176
    %v184 = vpack.c.b16 %v179, %v178
    %v185 = vpack.c.b16 %v181, %v180
    %vm190 = vcmask 523264
    %v192 = vsel %vm190, %v119, 0
    %v195 = vsel %vm190, %v120, 0
    %v198 = vsel %vm190, %v121, 0
    %v201 = vsel %vm190, %v122, 0
    %v204 = vsel %vm190, %v123, 0
    %v207 = vsel %vm190, %v124, 0
    %v210 = vsel %vm190, %v125, 0
    %v213 = vsel %vm190, %v126, 0
    %v216 = vsel %vm190, %v127, 0
    %v219 = vsel %vm190, %v128, 0
    %v222 = vsel %vm190, %v129, 0
    %v225 = vsel %vm190, %v130, 0
    %v228 = vsel %vm190, %v131, 0
    %v231 = vsel %vm190, %v132, 0
    %v234 = vsel %vm190, %v133, 0
    %v237 = vsel %vm190, %v134, 0
    %v240 = vsel %vm190, %v135, 0
    %v243 = vsel %vm190, %v136, 0
    %v246 = vsel %vm190, %v137, 0
    %v249 = vsel %vm190, %v138, 0
    %v252 = vsel %vm190, %v139, 0
    %v255 = vsel %vm190, %v140, 0
    %v258 = vsel %vm190, %v141, 0
    %v261 = vsel %vm190, %v142, 0
    %v264 = vsel %vm190, %v143, 0
    %v267 = vsel %vm190, %v144, 0
    %v270 = vsel %vm190, %v145, 0
    %v273 = vsel %vm190, %v146, 0
    %v276 = vsel %vm190, %v147, 0
    %v279 = vsel %vm190, %v148, 0
    %v282 = vsel %vm190, %v149, 0
    %v285 = vsel %vm190, %v150, 0
    %287 = vmatprep.subr.bf16.mxu0 0
    %288 = vmatpush1.bf16.msra.mxu0 %v182
    %289 = vmatprep.subr.bf16.mxu0 0
    %290 = vmatpush1.bf16.msra.mxu0 %v183
    %291 = vmatprep.subr.bf16.mxu0 0
    %292 = vmatpush1.bf16.msra.mxu0 %v184
    %293 = vmatprep.subr.bf16.mxu0 0
    %294 = vmatpush1.bf16.msra.mxu0 %v185
    %295 = vmatprep.subr.bf16.mxu0 0
    %296 = vmatpush1.bf16.msra.mxu0 0
    %297 = vmatprep.subr.bf16.mxu0 0
    %298 = vmatpush1.bf16.msra.mxu0 0
    %299 = vmatprep.subr.bf16.mxu0 0
    %300 = vmatpush1.bf16.msra.mxu0 0
    %301 = vmatprep.subr.bf16.mxu0 0
    %302 = vmatpush1.bf16.msra.mxu0 0
    %303 = vmatprep.subr.bf16.mxu0 0
    %304 = vmatpush1.bf16.msra.mxu0 0
    %305 = vmatprep.subr.bf16.mxu0 0
    %306 = vmatpush1.bf16.msra.mxu0 0
    %307 = vmatprep.subr.bf16.mxu0 0
    %308 = vmatpush1.bf16.msra.mxu0 0
    %309 = vmatprep.subr.bf16.mxu0 0
    %310 = vmatpush1.bf16.msra.mxu0 0
    %311 = vmatprep.subr.bf16.mxu0 0
    %312 = vmatpush1.bf16.msra.mxu0 0
    %313 = vmatprep.subr.bf16.mxu0 0
    %314 = vmatpush1.bf16.msra.mxu0 0
    %315 = vmatprep.subr.bf16.mxu0 0
    %316 = vmatpush1.bf16.msra.mxu0 0
    %317 = vmatprep.subr.bf16.mxu0 0
    %318 = vmatpush1.bf16.msra.mxu0 0
    %319 = vmatprep.mubr.bf16.mxu0 0
    %320 = vmatmul.mubr.bf16.gmra.mrb[0].mxu0 %v192
    %v321 = vpop.f32.mrb[0].mxu0
    %v322 = vadd.f32 %v164, %v321
    %v323 = vpop.f32.mrb[0].mxu0
    %v324 = vpop.f32.mrb[0].mxu0
    %v325 = vadd.f32 %v164, %v324
    %v326 = vpop.f32.mrb[0].mxu0
    %327 = vmatprep.mubr.bf16.mxu0 0
    %328 = vmatmul.mubr.bf16.gmra.mrb[0].mxu0 %v195
    %v329 = vpop.f32.mrb[0].mxu0
    %v330 = vadd.f32 %v164, %v329
    %v331 = vpop.f32.mrb[0].mxu0
    %v332 = vpop.f32.mrb[0].mxu0
    %v333 = vadd.f32 %v164, %v332
    %v334 = vpop.f32.mrb[0].mxu0
    %335 = vmatprep.mubr.bf16.mxu0 0
    %336 = vmatmul.mubr.bf16.gmra.mrb[0].mxu0 %v198
    %v337 = vpop.f32.mrb[0].mxu0
    %v338 = vadd.f32 %v164, %v337
    %v339 = vpop.f32.mrb[0].mxu0
    %v340 = vpop.f32.mrb[0].mxu0
    %v341 = vadd.f32 %v164, %v340
    %v342 = vpop.f32.mrb[0].mxu0
    %343 = vmatprep.mubr.bf16.mxu0 0
    %344 = vmatmul.mubr.bf16.gmra.mrb[0].mxu0 %v201
    %v345 = vpop.f32.mrb[0].mxu0
    %v346 = vadd.f32 %v164, %v345
    %v347 = vpop.f32.mrb[0].mxu0
    %v348 = vpop.f32.mrb[0].mxu0
    %v349 = vadd.f32 %v164, %v348
    %v350 = vpop.f32.mrb[0].mxu0
    %351 = vmatprep.mubr.bf16.mxu0 0
    %352 = vmatmul.mubr.bf16.gmra.mrb[0].mxu0 %v204
    %v353 = vpop.f32.mrb[0].mxu0
    %v354 = vadd.f32 %v164, %v353
    %v355 = vpop.f32.mrb[0].mxu0
    %v356 = vpop.f32.mrb[0].mxu0
    %v357 = vadd.f32 %v164, %v356
    %v358 = vpop.f32.mrb[0].mxu0
    %359 = vmatprep.mubr.bf16.mxu0 0
    %360 = vmatmul.mubr.bf16.gmra.mrb[0].mxu0 %v207
    %v361 = vpop.f32.mrb[0].mxu0
    %v362 = vadd.f32 %v164, %v361
    %v363 = vpop.f32.mrb[0].mxu0
    %v364 = vpop.f32.mrb[0].mxu0
    %v365 = vadd.f32 %v164, %v364
    %v366 = vpop.f32.mrb[0].mxu0
    %367 = vmatprep.mubr.bf16.mxu0 0
    %368 = vmatmul.mubr.bf16.gmra.mrb[0].mxu0 %v210
    %v369 = vpop.f32.mrb[0].mxu0
    %v370 = vadd.f32 %v164, %v369
    %v371 = vpop.f32.mrb[0].mxu0
    %v372 = vpop.f32.mrb[0].mxu0
    %v373 = vadd.f32 %v164, %v372
    %v374 = vpop.f32.mrb[0].mxu0
    %375 = vmatprep.mubr.bf16.mxu0 0
    %376 = vmatmul.mubr.bf16.gmra.mrb[0].mxu0 %v213
    %v377 = vpop.f32.mrb[0].mxu0
    %v378 = vadd.f32 %v164, %v377
    %v379 = vpop.f32.mrb[0].mxu0
    %v380 = vpop.f32.mrb[0].mxu0
    %v381 = vadd.f32 %v164, %v380
    %v382 = vpop.f32.mrb[0].mxu0
    %383 = vmatprep.mubr.bf16.mxu0 0
    %384 = vmatmul.mubr.bf16.gmra.mrb[0].mxu0 %v216
    %v385 = vpop.f32.mrb[0].mxu0
    %v386 = vadd.f32 %v164, %v385
    %v387 = vpop.f32.mrb[0].mxu0
    %v388 = vpop.f32.mrb[0].mxu0
    %v389 = vadd.f32 %v164, %v388
    %v390 = vpop.f32.mrb[0].mxu0
    %391 = vmatprep.mubr.bf16.mxu0 0
    %392 = vmatmul.mubr.bf16.gmra.mrb[0].mxu0 %v219
    %v393 = vpop.f32.mrb[0].mxu0
    %v394 = vadd.f32 %v164, %v393
    %v395 = vpop.f32.mrb[0].mxu0
    %v396 = vpop.f32.mrb[0].mxu0
    %v397 = vadd.f32 %v164, %v396
    %v398 = vpop.f32.mrb[0].mxu0
    %399 = vmatprep.mubr.bf16.mxu0 0
    %400 = vmatmul.mubr.bf16.gmra.mrb[0].mxu0 %v222
    %v401 = vpop.f32.mrb[0].mxu0
    %v402 = vadd.f32 %v164, %v401
    %v403 = vpop.f32.mrb[0].mxu0
    %v404 = vpop.f32.mrb[0].mxu0
    %v405 = vadd.f32 %v164, %v404
    %v406 = vpop.f32.mrb[0].mxu0
    %407 = vmatprep.mubr.bf16.mxu0 0
    %408 = vmatmul.mubr.bf16.gmra.mrb[0].mxu0 %v225
    %v409 = vpop.f32.mrb[0].mxu0
    %v410 = vadd.f32 %v164, %v409
    %v411 = vpop.f32.mrb[0].mxu0
    %v412 = vpop.f32.mrb[0].mxu0
    %v413 = vadd.f32 %v164, %v412
    %v414 = vpop.f32.mrb[0].mxu0
    %415 = vmatprep.mubr.bf16.mxu0 0
    %416 = vmatmul.mubr.bf16.gmra.mrb[0].mxu0 %v228
    %v417 = vpop.f32.mrb[0].mxu0
    %v418 = vadd.f32 %v164, %v417
    %v419 = vpop.f32.mrb[0].mxu0
    %v420 = vpop.f32.mrb[0].mxu0
    %v421 = vadd.f32 %v164, %v420
    %v422 = vpop.f32.mrb[0].mxu0
    %423 = vmatprep.mubr.bf16.mxu0 0
    %424 = vmatmul.mubr.bf16.gmra.mrb[0].mxu0 %v231
    %v425 = vpop.f32.mrb[0].mxu0
    %v426 = vadd.f32 %v164, %v425
    %v427 = vpop.f32.mrb[0].mxu0
    %v428 = vpop.f32.mrb[0].mxu0
    %v429 = vadd.f32 %v164, %v428
    %v430 = vpop.f32.mrb[0].mxu0
    %431 = vmatprep.mubr.bf16.mxu0 0
    %432 = vmatmul.mubr.bf16.gmra.mrb[0].mxu0 %v234
    %v433 = vpop.f32.mrb[0].mxu0
    %v434 = vadd.f32 %v164, %v433
    %v435 = vpop.f32.mrb[0].mxu0
    %v436 = vpop.f32.mrb[0].mxu0
    %v437 = vadd.f32 %v164, %v436
    %v438 = vpop.f32.mrb[0].mxu0
    %439 = vmatprep.mubr.bf16.mxu0 0
    %440 = vmatmul.mubr.bf16.gmra.mrb[0].mxu0 %v237
    %v441 = vpop.f32.mrb[0].mxu0
    %v442 = vadd.f32 %v164, %v441
    %v443 = vpop.f32.mrb[0].mxu0
    %v444 = vpop.f32.mrb[0].mxu0
    %v445 = vadd.f32 %v164, %v444
    %v446 = vpop.f32.mrb[0].mxu0
    %447 = vmatprep.mubr.bf16.mxu0 0
    %448 = vmatmul.mubr.bf16.gmra.mrb[0].mxu0 %v240
    %v449 = vpop.f32.mrb[0].mxu0
    %v450 = vadd.f32 %v164, %v449
    %v451 = vpop.f32.mrb[0].mxu0
    %v452 = vpop.f32.mrb[0].mxu0
    %v453 = vadd.f32 %v164, %v452
    %v454 = vpop.f32.mrb[0].mxu0
    %455 = vmatprep.mubr.bf16.mxu0 0
    %456 = vmatmul.mubr.bf16.gmra.mrb[0].mxu0 %v243
    %v457 = vpop.f32.mrb[0].mxu0
    %v458 = vadd.f32 %v164, %v457
    %v459 = vpop.f32.mrb[0].mxu0
    %v460 = vpop.f32.mrb[0].mxu0
    %v461 = vadd.f32 %v164, %v460
    %v462 = vpop.f32.mrb[0].mxu0
    %463 = vmatprep.mubr.bf16.mxu0 0
    %464 = vmatmul.mubr.bf16.gmra.mrb[0].mxu0 %v246
    %v465 = vpop.f32.mrb[0].mxu0
    %v466 = vadd.f32 %v164, %v465
    %v467 = vpop.f32.mrb[0].mxu0
    %v468 = vpop.f32.mrb[0].mxu0
    %v469 = vadd.f32 %v164, %v468
    %v470 = vpop.f32.mrb[0].mxu0
    %471 = vmatprep.mubr.bf16.mxu0 0
    %472 = vmatmul.mubr.bf16.gmra.mrb[0].mxu0 %v249
    %v473 = vpop.f32.mrb[0].mxu0
    %v474 = vadd.f32 %v164, %v473
    %v475 = vpop.f32.mrb[0].mxu0
    %v476 = vpop.f32.mrb[0].mxu0
    %v477 = vadd.f32 %v164, %v476
    %v478 = vpop.f32.mrb[0].mxu0
    %479 = vmatprep.mubr.bf16.mxu0 0
    %480 = vmatmul.mubr.bf16.gmra.mrb[0].mxu0 %v252
    %v481 = vpop.f32.mrb[0].mxu0
    %v482 = vadd.f32 %v164, %v481
    %v483 = vpop.f32.mrb[0].mxu0
    %v484 = vpop.f32.mrb[0].mxu0
    %v485 = vadd.f32 %v164, %v484
    %v486 = vpop.f32.mrb[0].mxu0
    %487 = vmatprep.mubr.bf16.mxu0 0
    %488 = vmatmul.mubr.bf16.gmra.mrb[0].mxu0 %v255
    %v489 = vpop.f32.mrb[0].mxu0
    %v490 = vadd.f32 %v164, %v489
    %v491 = vpop.f32.mrb[0].mxu0
    %v492 = vpop.f32.mrb[0].mxu0
    %v493 = vadd.f32 %v164, %v492
    %v494 = vpop.f32.mrb[0].mxu0
    %495 = vmatprep.mubr.bf16.mxu0 0
    %496 = vmatmul.mubr.bf16.gmra.mrb[0].mxu0 %v258
    %v497 = vpop.f32.mrb[0].mxu0
    %v498 = vadd.f32 %v164, %v497
    %v499 = vpop.f32.mrb[0].mxu0
    %v500 = vpop.f32.mrb[0].mxu0
    %v501 = vadd.f32 %v164, %v500
    %v502 = vpop.f32.mrb[0].mxu0
    %503 = vmatprep.mubr.bf16.mxu0 0
    %504 = vmatmul.mubr.bf16.gmra.mrb[0].mxu0 %v261
    %v505 = vpop.f32.mrb[0].mxu0
    %v506 = vadd.f32 %v164, %v505
    %v507 = vpop.f32.mrb[0].mxu0
    %v508 = vpop.f32.mrb[0].mxu0
    %v509 = vadd.f32 %v164, %v508
    %v510 = vpop.f32.mrb[0].mxu0
    %511 = vmatprep.mubr.bf16.mxu0 0
    %512 = vmatmul.mubr.bf16.gmra.mrb[0].mxu0 %v264
    %v513 = vpop.f32.mrb[0].mxu0
    %v514 = vadd.f32 %v164, %v513
    %v515 = vpop.f32.mrb[0].mxu0
    %v516 = vpop.f32.mrb[0].mxu0
    %v517 = vadd.f32 %v164, %v516
    %v518 = vpop.f32.mrb[0].mxu0
    %519 = vmatprep.mubr.bf16.mxu0 0
    %520 = vmatmul.mubr.bf16.gmra.mrb[0].mxu0 %v267
    %v521 = vpop.f32.mrb[0].mxu0
    %v522 = vadd.f32 %v164, %v521
    %v523 = vpop.f32.mrb[0].mxu0
    %v524 = vpop.f32.mrb[0].mxu0
    %v525 = vadd.f32 %v164, %v524
    %v526 = vpop.f32.mrb[0].mxu0
    %527 = vmatprep.mubr.bf16.mxu0 0
    %528 = vmatmul.mubr.bf16.gmra.mrb[0].mxu0 %v270
    %v529 = vpop.f32.mrb[0].mxu0
    %v530 = vadd.f32 %v164, %v529
    %v531 = vpop.f32.mrb[0].mxu0
    %v532 = vpop.f32.mrb[0].mxu0
    %v533 = vadd.f32 %v164, %v532
    %v534 = vpop.f32.mrb[0].mxu0
    %535 = vmatprep.mubr.bf16.mxu0 0
    %536 = vmatmul.mubr.bf16.gmra.mrb[0].mxu0 %v273
    %v537 = vpop.f32.mrb[0].mxu0
    %v538 = vadd.f32 %v164, %v537
    %v539 = vpop.f32.mrb[0].mxu0
    %v540 = vpop.f32.mrb[0].mxu0
    %v541 = vadd.f32 %v164, %v540
    %v542 = vpop.f32.mrb[0].mxu0
    %543 = vmatprep.mubr.bf16.mxu0 0
    %544 = vmatmul.mubr.bf16.gmra.mrb[0].mxu0 %v276
    %v545 = vpop.f32.mrb[0].mxu0
    %v546 = vadd.f32 %v164, %v545
    %v547 = vpop.f32.mrb[0].mxu0
    %v548 = vpop.f32.mrb[0].mxu0
    %v549 = vadd.f32 %v164, %v548
    %v550 = vpop.f32.mrb[0].mxu0
    %551 = vmatprep.mubr.bf16.mxu0 0
    %552 = vmatmul.mubr.bf16.gmra.mrb[0].mxu0 %v279
    %v553 = vpop.f32.mrb[0].mxu0
    %v554 = vadd.f32 %v164, %v553
    %v555 = vpop.f32.mrb[0].mxu0
    %v556 = vpop.f32.mrb[0].mxu0
    %v557 = vadd.f32 %v164, %v556
    %v558 = vpop.f32.mrb[0].mxu0
    %559 = vmatprep.mubr.bf16.mxu0 0
    %560 = vmatmul.mubr.bf16.gmra.mrb[0].mxu0 %v282
    %v561 = vpop.f32.mrb[0].mxu0
    %v562 = vadd.f32 %v164, %v561
    %v563 = vpop.f32.mrb[0].mxu0
    %v564 = vpop.f32.mrb[0].mxu0
    %v565 = vadd.f32 %v164, %v564
    %v566 = vpop.f32.mrb[0].mxu0
    %567 = vmatprep.mubr.bf16.mxu0 0
    %568 = vmatmul.mubr.bf16.gmra.mrb[0].mxu0 %v285
    %v569 = vpop.f32.mrb[0].mxu0
    %v570 = vadd.f32 %v164, %v569
    %v571 = vpop.f32.mrb[0].mxu0
    %v572 = vpop.f32.mrb[0].mxu0
    %v573 = vadd.f32 %v164, %v572
    %v574 = vpop.f32.mrb[0].mxu0
    %575 = vdwg.mxu0
    %576 = vst [vmem:[#allocation8] sm:$0xff] %v322
    %577 = vst [vmem:[#allocation8 + $0x8] sm:$0xff] %v325
    %578 = vst [vmem:[#allocation8 + $0x10] sm:$0xff] %v330
    %579 = vst [vmem:[#allocation8 + $0x18] sm:$0xff] %v333
    %580 = vst [vmem:[#allocation8 + $0x20] sm:$0xff] %v338
    %581 = vst [vmem:[#allocation8 + $0x28] sm:$0xff] %v341
    %582 = vst [vmem:[#allocation8 + $0x30] sm:$0xff] %v346
    %583 = vst [vmem:[#allocation8 + $0x38] sm:$0xff] %v349
    %584 = vst [vmem:[#allocation8 + $0x40] sm:$0xff] %v354
    %585 = vst [vmem:[#allocation8 + $0x48] sm:$0xff] %v357
    %586 = vst [vmem:[#allocation8 + $0x50] sm:$0xff] %v362
    %587 = vst [vmem:[#allocation8 + $0x58] sm:$0xff] %v365
    %588 = vst [vmem:[#allocation8 + $0x60] sm:$0xff] %v370
    %589 = vst [vmem:[#allocation8 + $0x68] sm:$0xff] %v373
    %590 = vst [vmem:[#allocation8 + $0x70] sm:$0xff] %v378
    %591 = vst [vmem:[#allocation8 + $0x78] sm:$0xff] %v381
    %592 = vst [vmem:[#allocation8 + $0x80] sm:$0xff] %v386
    %593 = vst [vmem:[#allocation8 + $0x88] sm:$0xff] %v389
    %594 = vst [vmem:[#allocation8 + $0x90] sm:$0xff] %v394
    %595 = vst [vmem:[#allocation8 + $0x98] sm:$0xff] %v397
    %596 = vst [vmem:[#allocation8 + $0xa0] sm:$0xff] %v402
    %597 = vst [vmem:[#allocation8 + $0xa8] sm:$0xff] %v405
    %598 = vst [vmem:[#allocation8 + $0xb0] sm:$0xff] %v410
    %599 = vst [vmem:[#allocation8 + $0xb8] sm:$0xff] %v413
    %600 = vst [vmem:[#allocation8 + $0xc0] sm:$0xff] %v418
    %601 = vst [vmem:[#allocation8 + $0xc8] sm:$0xff] %v421
    %602 = vst [vmem:[#allocation8 + $0xd0] sm:$0xff] %v426
    %603 = vst [vmem:[#allocation8 + $0xd8] sm:$0xff] %v429
    %604 = vst [vmem:[#allocation8 + $0xe0] sm:$0xff] %v434
    %605 = vst [vmem:[#allocation8 + $0xe8] sm:$0xff] %v437
    %606 = vst [vmem:[#allocation8 + $0xf0] sm:$0xff] %v442
    %607 = vst [vmem:[#allocation8 + $0xf8] sm:$0xff] %v445
    %608 = vst [vmem:[#allocation8 + $0x100] sm:$0xff] %v450
    %609 = vst [vmem:[#allocation8 + $0x108] sm:$0xff] %v453
    %610 = vst [vmem:[#allocation8 + $0x110] sm:$0xff] %v458
    %611 = vst [vmem:[#allocation8 + $0x118] sm:$0xff] %v461
    %612 = vst [vmem:[#allocation8 + $0x120] sm:$0xff] %v466
    %613 = vst [vmem:[#allocation8 + $0x128] sm:$0xff] %v469
    %614 = vst [vmem:[#allocation8 + $0x130] sm:$0xff] %v474
    %615 = vst [vmem:[#allocation8 + $0x138] sm:$0xff] %v477
    %616 = vst [vmem:[#allocation8 + $0x140] sm:$0xff] %v482
    %617 = vst [vmem:[#allocation8 + $0x148] sm:$0xff] %v485
    %618 = vst [vmem:[#allocation8 + $0x150] sm:$0xff] %v490
    %619 = vst [vmem:[#allocation8 + $0x158] sm:$0xff] %v493
    %620 = vst [vmem:[#allocation8 + $0x160] sm:$0xff] %v498
    %621 = vst [vmem:[#allocation8 + $0x168] sm:$0xff] %v501
    %622 = vst [vmem:[#allocation8 + $0x170] sm:$0xff] %v506
    %623 = vst [vmem:[#allocation8 + $0x178] sm:$0xff] %v509
    %624 = vst [vmem:[#allocation8 + $0x180] sm:$0xff] %v514
    %625 = vst [vmem:[#allocation8 + $0x188] sm:$0xff] %v517
    %626 = vst [vmem:[#allocation8 + $0x190] sm:$0xff] %v522
    %627 = vst [vmem:[#allocation8 + $0x198] sm:$0xff] %v525
    %628 = vst [vmem:[#allocation8 + $0x1a0] sm:$0xff] %v530
    %629 = vst [vmem:[#allocation8 + $0x1a8] sm:$0xff] %v533
    %630 = vst [vmem:[#allocation8 + $0x1b0] sm:$0xff] %v538
    %631 = vst [vmem:[#allocation8 + $0x1b8] sm:$0xff] %v541
    %632 = vst [vmem:[#allocation8 + $0x1c0] sm:$0xff] %v546
    %633 = vst [vmem:[#allocation8 + $0x1c8] sm:$0xff] %v549
    %634 = vst [vmem:[#allocation8 + $0x1d0] sm:$0xff] %v554
    %635 = vst [vmem:[#allocation8 + $0x1d8] sm:$0xff] %v557
    %636 = vst [vmem:[#allocation8 + $0x1e0] sm:$0xff] %v562
    %637 = vst [vmem:[#allocation8 + $0x1e8] sm:$0xff] %v565
    %638 = vst [vmem:[#allocation8 + $0x1f0] sm:$0xff] %v570
    %639 = vst [vmem:[#allocation8 + $0x1f8] sm:$0xff] %v573
    // Predicated region
    $region26: #{linear.1} parent=1 // pred_check
      _
    $region27: #{linear.1} parent=1 // pred_check_branch
      %641 = sbr.rel (0) target = $region29
    $region28: #{linear.1} parent=1 // pred_region
      %s643 = ssub.s32 8192, 8192
      %644 = vsyncadd [#allocation4], %s643
      %s645 = sshll.u32 [#allocation8], 4
      %s646 = int_to_ptr.vmem [resolvable:$true] %s645
      %651 = dma.vmem_to_hbm [thread:$0]  %s646, 8192, %s3, [#allocation4], 128, 128, 8
    $region29: #{linear.1} parent=1 // pred_fallthru
      _
    // Predicated region
    $region30: #{linear.1} parent=1 // pred_check
      _
    $region31: #{linear.1} parent=1 // pred_check_branch
      %653 = sbr.rel (0) target = $region33
    $region32: #{linear.1} parent=1 // pred_region
      %654 = dma.done [#allocation4], 8192
    $region33: #{linear.1} parent=1 // pred_fallthru
      _
    %655 = vsyncpa [#allocation3], 1
    %656 = vsyncpa [#allocation6], 1
    %657 = vsyncpa [#allocation4], 1

</llo_original>
